<compile_context>
chip_gen: v7x
topology: tpu7x:2x2x1
jax: 0.10.0
libtpu: 0.0.40
codegen_flags: <defaults>
</compile_context>

<pallas_src>
import functools

import jax
import jax.numpy as jnp
from jax import lax
from jax.experimental import pallas as pl
from jax.experimental.pallas import tpu as pltpu


def _round_up(x, m):
    return ((x + m - 1) // m) * m


def _gat_attention_kernel(f1_ref, f2_ref, adj_ref, out_ref, *, alpha):
    # e[i, j] = f1[i] + f2[j]  — (TM,1)+(1,TN) broadcast add on the VPU.
    e = f1_ref[...] + f2_ref[...]
    # LeakyReLU with negative slope alpha (0 < alpha < 1): 2 VPU ops.
    e = jnp.maximum(e, alpha * e)
    # attention = where(adj > 0, exp(e), 0).  exp goes to the EUP slot.
    # TODO(synk): exp() is un-stabilized (same as the PyTorch reference); a
    # downstream row-softmax on large pre-activations can overflow to inf.
    att = jnp.where(adj_ref[...] > 0, jnp.exp(e), 0.0)
    out_ref[...] = att.astype(out_ref.dtype)


def gat_attention(h_feat, W, a, adj, *, alpha=0.2, tm_max=512, tn_max=2048,
                  out_dtype=jnp.float32):
    """h_feat: [N, F_in], W: [F_in, F_out], a: [2*F_out, 1], adj: [N, N].

    Returns attention scores [N, N] (pre-softmax, exactly as the module does).
    `adj` is streamed in whatever dtype it arrives in (f32 or a precomputed
    int8/bool mask both work); the `> 0` compare happens inside the kernel.
    """
    N, _ = h_feat.shape
    f_out = W.shape[1]

    # --- Hoisted tiny matmuls (wrapper-side, plain XLA) -------------------
    # a packed as [a1 | a2] -> [F_out, 2]; a_reduced = W @ a_packed -> [F_in, 2]
    a_packed = jnp.concatenate([a[:f_out, :], a[f_out:, :]], axis=1)
    a_reduced = jnp.dot(W, a_packed, precision=lax.Precision.HIGHEST)
    f = jnp.dot(h_feat, a_reduced, precision=lax.Precision.HIGHEST)   # [N, 2]
    f1 = f[:, 0:1]        # [N, 1]  "source" contribution (per output row)
    f2 = f[:, 1:2].T      # [1, N]  "target" contribution (per output col)

    # --- Tile selection (no padding / slicing of the O(N^2) arrays) -------
    # Blocks need not divide N: boundary input reads are garbage-padded by the
    # pipeline (only landing in dropped output cells) and boundary output
    # writes are masked, so shape-(N, N) out_shape is produced directly.
    tm = min(tm_max, N)   # == N (full dim) or a multiple of 8
    tn = min(tn_max, N)   # == N (full dim) or a multiple of 128 (lane-dense)

    # Megacore (v7x has 2 TCs): for mid-sized N keep >=2 blocks on a parallel
    # axis so both cores get work.  No-op cost on 1-TC chips (v5e/v6e).
    if N >= 256 and pl.cdiv(N, tm) == 1 and pl.cdiv(N, tn) == 1:
        tm = min(_round_up(pl.cdiv(N, 2), 32), N)   # 32: legal for int8 adj too

    grid = (pl.cdiv(N, tm), pl.cdiv(N, tn))

    adj_bytes = jnp.dtype(adj.dtype).itemsize
    out_bytes = jnp.dtype(out_dtype).itemsize
    cost = pl.CostEstimate(
        flops=5 * N * N,                                   # add, mul, max, cmp, sel
        transcendentals=N * N,                             # exp
        bytes_accessed=(adj_bytes + out_bytes) * N * N + 8 * N,
    )

    return pl.pallas_call(
        functools.partial(_gat_attention_kernel, alpha=float(alpha)),
        out_shape=jax.ShapeDtypeStruct((N, N), out_dtype),
        grid=grid,
        in_specs=[
            pl.BlockSpec((tm, 1), lambda i, j: (i, 0)),    # f1 col; re-DMA only when i changes
            pl.BlockSpec((1, tn), lambda i, j: (0, j)),    # f2 row
            pl.BlockSpec((tm, tn), lambda i, j: (i, j)),   # adj streamed as-is
        ],
        out_specs=pl.BlockSpec((tm, tn), lambda i, j: (i, j)),
        compiler_params=pltpu.CompilerParams(
            dimension_semantics=("parallel", "parallel"),
            vmem_limit_bytes=32 * 1024 * 1024),
        cost_estimate=cost,
    )(f1, f2, adj)


def _reference(h_feat, W, a, adj, alpha):
    """Pure-JAX mirror of the PyTorch forward (for validation)."""
    N = h_feat.shape[0]
    f_out = W.shape[1]
    wh = jnp.dot(h_feat, W, precision=lax.Precision.HIGHEST)
    wh_rep_chunks = jnp.repeat(wh, N, axis=0)            # repeat_interleave(N, dim=0)
    wh_rep_alt = jnp.tile(wh, (N, 1))                    # repeat(N, 1)
    a_input = jnp.concatenate([wh_rep_chunks, wh_rep_alt], axis=1)
    a_input = a_input.reshape(N, N, 2 * f_out)
    e = jnp.squeeze(jnp.matmul(a_input, a, precision=lax.Precision.HIGHEST), axis=2)
    e = jnp.where(e > 0, e, alpha * e)                   # LeakyReLU(alpha)
    return jnp.where(adj > 0, jnp.exp(e), jnp.zeros_like(e))


if __name__ == "__main__":
    # Small shapes consistent with the module: N nodes, in/out feature dims.
    N = 16
    in_features = 8
    out_features = 32
    alpha = 0.2  # LeakyReLU negative slope
    # dropout / concat / relu are unused in this forward pass.

    key = jax.random.PRNGKey(0)
    k_h, k_adj, k_w, k_a = jax.random.split(key, 4)

    h_feat = jax.random.normal(k_h, (N, in_features), dtype=jnp.float32)
    # Sparse-ish adjacency with self loops.
    adj_rand = jax.random.uniform(k_adj, (N, N))
    adj = (adj_rand > 0.6).astype(jnp.float32)
    adj = jnp.maximum(adj, jnp.eye(N, dtype=jnp.float32))

    # Deterministic parameter init matching nn.init.normal_(.., 0, 0.1).
    W = 0.1 * jax.random.normal(k_w, (in_features, out_features), dtype=jnp.float32)
    a = 0.1 * jax.random.normal(k_a, (2 * out_features, 1), dtype=jnp.float32)

    out = gat_attention(h_feat, W, a, adj, alpha=alpha)
    out = jax.block_until_ready(out)

    ref = _reference(h_feat, W, a, adj, alpha)
    assert out.shape == (N, N)
    assert jnp.allclose(out, ref, atol=1e-5, rtol=1e-5)

    print("KERNEL_OK")
</pallas_src>

<mosaic_0001>
module attributes {stable_mosaic.version = 11 : i64} {
  func.func @_gat_attention_kernel(%arg0: i32, %arg1: i32, %arg2: memref<16x1xf32, #tpu.memory_space<vmem>>, %arg3: memref<1x16xf32, #tpu.memory_space<vmem>>, %arg4: memref<16x16xf32, #tpu.memory_space<vmem>>, %arg5: memref<16x16xf32, #tpu.memory_space<vmem>>) attributes {dimension_semantics = [#tpu.dimension_semantics<parallel>, #tpu.dimension_semantics<parallel>], iteration_bounds = array<i64: 1, 1>, scalar_prefetch = 0 : i64, scratch_operands = 0 : i64, tpu.core_type = #tpu.core_type<tc>, window_params = [{transform_indices = @transform_0, window_bounds = array<i64: 16, 1>}, {transform_indices = @transform_1, window_bounds = array<i64: 1, 16>}, {transform_indices = @transform_2, window_bounds = array<i64: 16, 16>}, {transform_indices = @transform_3, window_bounds = array<i64: 16, 16>}]} {
    %c0 = arith.constant 0 : index
    %c0_0 = arith.constant 0 : index
    %0 = vector.load %arg2[%c0, %c0_0] : memref<16x1xf32, #tpu.memory_space<vmem>>, vector<16x1xf32>
    %c0_1 = arith.constant 0 : index
    %c0_2 = arith.constant 0 : index
    %1 = vector.load %arg3[%c0_1, %c0_2] : memref<1x16xf32, #tpu.memory_space<vmem>>, vector<1x16xf32>
    %2 = vector.broadcast %0 : vector<16x1xf32> to vector<16x16xf32>
    %3 = vector.broadcast %1 : vector<1x16xf32> to vector<16x16xf32>
    %4 = arith.addf %2, %3 : vector<16x16xf32>
    %cst = arith.constant 2.000000e-01 : f32
    %5 = vector.broadcast %cst : f32 to vector<16x16xf32>
    %6 = arith.mulf %5, %4 : vector<16x16xf32>
    %7 = arith.maximumf %4, %6 : vector<16x16xf32>
    %c0_3 = arith.constant 0 : index
    %c0_4 = arith.constant 0 : index
    %8 = vector.load %arg4[%c0_3, %c0_4] : memref<16x16xf32, #tpu.memory_space<vmem>>, vector<16x16xf32>
    %cst_5 = arith.constant 0.000000e+00 : f32
    %9 = vector.broadcast %cst_5 : f32 to vector<16x16xf32>
    %10 = arith.cmpf ogt, %8, %9 : vector<16x16xf32>
    %11 = math.exp %7 : vector<16x16xf32>
    %cst_6 = arith.constant 0.000000e+00 : f32
    %12 = vector.broadcast %cst_6 : f32 to vector<16x16xf32>
    %13 = arith.select %10, %11, %12 : vector<16x16xi1>, vector<16x16xf32>
    %c0_7 = arith.constant 0 : index
    %c0_8 = arith.constant 0 : index
    %14 = vector.load %arg5[%c0_7, %c0_8] : memref<16x16xf32, #tpu.memory_space<vmem>>, vector<16x16xf32>
    tpu.vector_store %arg5[%c0_7, %c0_8], %13 {strides = array<i32>} : memref<16x16xf32, #tpu.memory_space<vmem>>, vector<16x16xf32>,
    return
  }
  func.func @transform_0(%arg0: i32, %arg1: i32) -> (i32, i32) {
    %c0_i32 = arith.constant 0 : i32
    %c0_i32_0 = arith.constant 0 : i32
    return %arg0, %c0_i32 : i32, i32
  }
  func.func @transform_1(%arg0: i32, %arg1: i32) -> (i32, i32) {
    %c0_i32 = arith.constant 0 : i32
    %c0_i32_0 = arith.constant 0 : i32
    return %c0_i32, %arg1 : i32, i32
  }
  func.func @transform_2(%arg0: i32, %arg1: i32) -> (i32, i32) {
    %c0_i32 = arith.constant 0 : i32
    return %arg0, %arg1 : i32, i32
  }
  func.func @transform_3(%arg0: i32, %arg1: i32) -> (i32, i32) {
    %c0_i32 = arith.constant 0 : i32
    return %arg0, %arg1 : i32, i32
  }
}

</mosaic_0001>

<llo_original>
// kernel: tpu_custom_call.1
$region0: #{tpu_custom_call.1}
  #allocation0 [shape = 'u32[]', space=smem, size = 0x4, offset = 0x4, fixed_abs, tag = 'smem constant byte address 0x4 - core index']
  #allocation1 [shape = 'u32[144,128]{1,0:T(1,128)}', space=vmem, size = 0x12000, scoped, tag = 'internal scratch']
  %s0 = inlined_call_operand.vmem [shape: f32[16,1], index: 0, kind: input, shape index: {}]
  %s1 = inlined_call_operand.vmem [shape: f32[1,16], index: 1, kind: input, shape index: {}]
  %s2 = inlined_call_operand.vmem [shape: f32[16,16], index: 2, kind: input, shape index: {}]
  %s3 = inlined_call_operand.hbm [shape: f32[16,16], index: 3, kind: output, shape index: {}]
  %s4 = sld [smem:[#allocation0]]
  $region22: #{tpu_custom_call.1} parent=0
    _
  %s6 = ssub.s32 1, %s4
  %s7 = scalar_select 0, %s6, %s4
  $region1: #{tpu_custom_call.1} parent=0
    #allocation2 [shape = 'u8[8192]{0}', space=vmem, size = 0x2000, scoped, tag = 'output window, operand 0, single buffered']
    #allocation3 [shape = 's32[1]{0}', space=sflag, size = 0x4, scoped, tag = 'scoped memory for tpu_custom_call.1']
    %8 = vsyncpa [#allocation3], 0
    // Predicated region
    $region2: #{tpu_custom_call.1} parent=1 // pred_check
      _
    $region3: #{tpu_custom_call.1} parent=1 // pred_check_branch
      %10 = sbr.rel (0) target = $region5
    $region4: #{tpu_custom_call.1} parent=1 // pred_region
      _
    $region5: #{tpu_custom_call.1} parent=1 // pred_fallthru
      _
    // Predicated region
    $region6: #{tpu_custom_call.1} parent=1 // pred_check
      _
    $region7: #{tpu_custom_call.1} parent=1 // pred_check_branch
      %12 = sbr.rel (0) target = $region9
    $region8: #{tpu_custom_call.1} parent=1 // pred_region
      _
    $region9: #{tpu_custom_call.1} parent=1 // pred_fallthru
      _
    // Predicated region
    $region10: #{tpu_custom_call.1} parent=1 // pred_check
      _
    $region11: #{tpu_custom_call.1} parent=1 // pred_check_branch
      %14 = sbr.rel (0) target = $region13
    $region12: #{tpu_custom_call.1} parent=1 // pred_region
      _
    $region13: #{tpu_custom_call.1} parent=1 // pred_fallthru
      _
    %v15 = vld [vmem:[%s0] sm:$0xff]
    %v16 = vld [vmem:[%s0 + $0x8] sm:$0xff]
    %v17 = vld [vmem:[%s1] sm:$0x1]
    %19 = vset.pattern.permute.xlu0 0
    %20 = vperm.xlu0 %19, %v15
    %v21 = vpop.permute.xlu0 %20
    %24 = vset.pattern.permute.xlu0 0
    %25 = vperm.xlu0 %24, %v16
    %v26 = vpop.permute.xlu0 %25
    %v29 = vlaneseq
    %v30 = vshrl.u32 %v29, 7
    %v31 = vsub.s32 0, %v30
    %v32 = vrot.slane %v17, %v31
    %v34 = vadd.f32 %v21, %v32
    %v35 = vadd.f32 %v26, %v32
    %v36 = vmul.f32 %v34, 0.2
    %v37 = vmul.f32 %v35, 0.2
    %v38 = vmax.f32 %v34, %v36
    %v39 = vmax.f32 %v35, %v37
    %v40 = vld [vmem:[%s2] sm:$0xff]
    %v41 = vld [vmem:[%s2 + $0x8] sm:$0xff]
    %vm42 = vcmp.gt.f32.partialorder %v40, 0.0
    %vm43 = vcmp.gt.f32.partialorder %v41, 0.0
    %v44 = vmul.f32 %v38, 1.442695
    %v45 = vpow.pop %v44
    %v46 = vmul.f32 %v39, 1.442695
    %v47 = vpow.pop %v46
    %v48 = vsel %vm42, %v45, 0.0
    %v49 = vsel %vm43, %v47, 0.0
    %vm50 = vcmask 130048
    %51 = vst.msk [vmem:[#allocation2] sm:$0xff] %vm50, %v48
    %52 = vst.msk [vmem:[#allocation2 + $0x8] sm:$0xff] %vm50, %v49
    // Predicated region
    $region14: #{tpu_custom_call.1} parent=1 // pred_check
      _
    $region15: #{tpu_custom_call.1} parent=1 // pred_check_branch
      %54 = sbr.rel (0) target = $region17
    $region16: #{tpu_custom_call.1} parent=1 // pred_region
      %s56 = ssub.s32 256, 256
      %57 = vsyncadd [#allocation3], %s56
      %s58 = sshll.u32 [#allocation2], 4
      %s59 = int_to_ptr.vmem [resolvable:$true] %s58
      %64 = dma.vmem_to_hbm [thread:$0]  %s59, 256, %s3, [#allocation3], 128, 128, 8
    $region17: #{tpu_custom_call.1} parent=1 // pred_fallthru
      _
    // Predicated region
    $region18: #{tpu_custom_call.1} parent=1 // pred_check
      _
    $region19: #{tpu_custom_call.1} parent=1 // pred_check_branch
      %66 = sbr.rel (0) target = $region21
    $region20: #{tpu_custom_call.1} parent=1 // pred_region
      %67 = dma.done [#allocation3], 256
    $region21: #{tpu_custom_call.1} parent=1 // pred_fallthru
      _
    %68 = vsyncpa [#allocation3], 1

</llo_original>
